<compile_context>
chip_gen: v7x
topology: tpu7x:2x2x1
jax: 0.10.0
libtpu: 0.0.40
codegen_flags: <defaults>
</compile_context>

<pallas_src>
import jax
import jax.numpy as jnp
from jax.experimental import pallas as pl
from jax.experimental.pallas import tpu as pltpu

IN_FEATURES = 180


def mlp_kernel(x_ref, w1_ref, b1_ref, w2_ref, b2_ref, w3_ref, b3_ref, o_ref):
    # One (TM, 180) row tile of x; all three Linear layers + activations fused.
    x = x_ref[...]  # already float32 -- no redundant astype

    # Linear(180 -> 10) + ReLU
    h1 = jnp.dot(x, w1_ref[...], preferred_element_type=jnp.float32) + b1_ref[...]
    h1 = jnp.maximum(h1, 0.0)

    # Linear(10 -> 4) + ReLU
    h2 = jnp.dot(h1, w2_ref[...], preferred_element_type=jnp.float32) + b2_ref[...]
    h2 = jnp.maximum(h2, 0.0)

    # Linear(4 -> 1) + Sigmoid (kept exact so semantics match the nn.Module).
    z = jnp.dot(h2, w3_ref[...], preferred_element_type=jnp.float32) + b3_ref[...]
    o_ref[...] = (1.0 / (1.0 + jnp.exp(-z))).astype(o_ref.dtype)


def _round_up(a, b):
    return ((a + b - 1) // b) * b


def neural_network_2c_forward(x, params, *, tm_max=8192):
    """x: (B, S, 180) float32 -> (B*S, 1) float32."""
    w1, b1, w2, b2, w3, b3 = params
    B, S, F = x.shape
    assert F == IN_FEATURES
    M = B * S
    x2d = x.reshape(M, F)  # nn.Flatten(start_dim=0, end_dim=1)

    # Row tile: multiple of 8 (sublane constraint), capped at tm_max, and sized
    # so the grid has at least 2 blocks (both v7x TensorCores get work).
    tm = min(tm_max, max(8, _round_up(pl.cdiv(M, 2), 8)))
    grid = (pl.cdiv(M, tm),)  # partial last block: read-padded / write-masked

    resident = lambda i: (0, 0)  # constant block index -> fetched once, stays in VMEM

    out = pl.pallas_call(
        mlp_kernel,
        out_shape=jax.ShapeDtypeStruct((M, 1), jnp.float32),
        grid=grid,
        in_specs=[
            pl.BlockSpec((tm, F), lambda i: (i, 0)),  # x: pipelined row tiles
            pl.BlockSpec(w1.shape, resident),          # (180, 10)
            pl.BlockSpec(b1.shape, resident),          # (1, 10)
            pl.BlockSpec(w2.shape, resident),          # (10, 4)
            pl.BlockSpec(b2.shape, resident),          # (1, 4)
            pl.BlockSpec(w3.shape, resident),          # (4, 1)
            pl.BlockSpec(b3.shape, resident),          # (1, 1)
        ],
        out_specs=pl.BlockSpec((tm, 1), lambda i: (i, 0)),
        compiler_params=pltpu.CompilerParams(
            # Independent row blocks: let v7x's two TensorCores split the grid.
            dimension_semantics=("parallel",),
            # ~3 KiB/row (lane-padded x double-buffered + padded intermediates):
            # TM=8192 ~ 24-28 MiB.  48 MiB clears v5e's 16 MiB scoped default
            # and stays under v7x's 64 MiB physical VMEM.
            vmem_limit_bytes=48 * 1024 * 1024,
        ),
    )(x2d, w1, b1, w2, b2, w3, b3)
    return out


def init_params(key):
    """PyTorch nn.Linear default init: U(-1/sqrt(fan_in), 1/sqrt(fan_in))."""
    dims = [(IN_FEATURES, 10), (10, 4), (4, 1)]
    params = []
    for fan_in, fan_out in dims:
        key, kw, kb = jax.random.split(key, 3)
        bound = 1.0 / jnp.sqrt(float(fan_in))
        # store W as (in, out) == W_torch.T
        w = jax.random.uniform(kw, (fan_in, fan_out), jnp.float32, -bound, bound)
        b = jax.random.uniform(kb, (1, fan_out), jnp.float32, -bound, bound)
        params.extend([w, b])
    return tuple(params)


def reference_forward(x, params):
    w1, b1, w2, b2, w3, b3 = params
    B, S, F = x.shape
    h = x.reshape(B * S, F)
    h = jnp.maximum(h @ w1 + b1, 0.0)
    h = jnp.maximum(h @ w2 + b2, 0.0)
    z = h @ w3 + b3
    return 1.0 / (1.0 + jnp.exp(-z))


if __name__ == "__main__":
    key = jax.random.PRNGKey(0)
    kx, kp, kx2 = jax.random.split(key, 3)
    params = init_params(kp)

    # Primary small case: (2, 8, 180) -> flatten(0, 1) -> 16 rows, grid of 2.
    B, S = 2, 8
    x = jax.random.normal(kx, (B, S, IN_FEATURES), jnp.float32)
    out = jax.block_until_ready(neural_network_2c_forward(x, params))
    ref = reference_forward(x, params)
    assert out.shape == (B * S, 1), out.shape
    assert jnp.allclose(out, ref, atol=1e-5, rtol=1e-5), "mismatch vs reference"

    # Second case exercising a multi-block grid with a partial last block:
    # M = 400, TM = 64 -> 7 blocks, last block has only 16 valid rows (masked).
    B2, S2 = 4, 100
    x2 = jax.random.normal(kx2, (B2, S2, IN_FEATURES), jnp.float32)
    out2 = jax.block_until_ready(neural_network_2c_forward(x2, params, tm_max=64))
    ref2 = reference_forward(x2, params)
    assert out2.shape == (B2 * S2, 1), out2.shape
    assert jnp.allclose(out2, ref2, atol=1e-5, rtol=1e-5), "mismatch vs reference (tiled)"

    print("KERNEL_OK")
</pallas_src>

<mosaic_0001>
module attributes {stable_mosaic.version = 11 : i64} {
  func.func @mlp_kernel(%arg0: i32, %arg1: memref<8x180xf32, #tpu.memory_space<vmem>>, %arg2: memref<180x10xf32, #tpu.memory_space<vmem>>, %arg3: memref<1x10xf32, #tpu.memory_space<vmem>>, %arg4: memref<10x4xf32, #tpu.memory_space<vmem>>, %arg5: memref<1x4xf32, #tpu.memory_space<vmem>>, %arg6: memref<4x1xf32, #tpu.memory_space<vmem>>, %arg7: memref<1x1xf32, #tpu.memory_space<vmem>>, %arg8: memref<8x1xf32, #tpu.memory_space<vmem>>) attributes {dimension_semantics = [#tpu.dimension_semantics<parallel>], iteration_bounds = array<i64: 2>, scalar_prefetch = 0 : i64, scratch_operands = 0 : i64, tpu.core_type = #tpu.core_type<tc>, window_params = [{transform_indices = @transform_0, window_bounds = array<i64: 8, 180>}, {pipeline_mode = #tpu.pipeline_mode<synchronous>, transform_indices = @transform_1, window_bounds = array<i64: 180, 10>}, {pipeline_mode = #tpu.pipeline_mode<synchronous>, transform_indices = @transform_2, window_bounds = array<i64: 1, 10>}, {pipeline_mode = #tpu.pipeline_mode<synchronous>, transform_indices = @transform_3, window_bounds = array<i64: 10, 4>}, {pipeline_mode = #tpu.pipeline_mode<synchronous>, transform_indices = @transform_4, window_bounds = array<i64: 1, 4>}, {pipeline_mode = #tpu.pipeline_mode<synchronous>, transform_indices = @transform_5, window_bounds = array<i64: 4, 1>}, {pipeline_mode = #tpu.pipeline_mode<synchronous>, transform_indices = @transform_6, window_bounds = array<i64: 1, 1>}, {transform_indices = @transform_7, window_bounds = array<i64: 8, 1>}]} {
    %c0 = arith.constant 0 : index
    %c0_0 = arith.constant 0 : index
    %0 = vector.load %arg1[%c0, %c0_0] : memref<8x180xf32, #tpu.memory_space<vmem>>, vector<8x180xf32>
    %c0_1 = arith.constant 0 : index
    %c0_2 = arith.constant 0 : index
    %1 = vector.load %arg2[%c0_1, %c0_2] : memref<180x10xf32, #tpu.memory_space<vmem>>, vector<180x10xf32>
    %cst = arith.constant dense<0.000000e+00> : vector<8x10xf32>
    %2 = tpu.matmul %0, %1, %cst {dimension_numbers = #tpu.dot_dimension_numbers<[1], [0], [0], [1], [0, 0, 1, 1], [], []>} : vector<8x180xf32>, vector<180x10xf32>, vector<8x10xf32> -> vector<8x10xf32>
    %c0_3 = arith.constant 0 : index
    %c0_4 = arith.constant 0 : index
    %3 = vector.load %arg3[%c0_3, %c0_4] : memref<1x10xf32, #tpu.memory_space<vmem>>, vector<1x10xf32>
    %4 = vector.broadcast %3 : vector<1x10xf32> to vector<8x10xf32>
    %5 = arith.addf %2, %4 : vector<8x10xf32>
    %cst_5 = arith.constant 0.000000e+00 : f32
    %6 = vector.broadcast %cst_5 : f32 to vector<8x10xf32>
    %7 = arith.maximumf %5, %6 : vector<8x10xf32>
    %c0_6 = arith.constant 0 : index
    %c0_7 = arith.constant 0 : index
    %8 = vector.load %arg4[%c0_6, %c0_7] : memref<10x4xf32, #tpu.memory_space<vmem>>, vector<10x4xf32>
    %cst_8 = arith.constant dense<0.000000e+00> : vector<8x4xf32>
    %9 = tpu.matmul %7, %8, %cst_8 {dimension_numbers = #tpu.dot_dimension_numbers<[1], [0], [0], [1], [0, 0, 1, 1], [], []>} : vector<8x10xf32>, vector<10x4xf32>, vector<8x4xf32> -> vector<8x4xf32>
    %c0_9 = arith.constant 0 : index
    %c0_10 = arith.constant 0 : index
    %10 = vector.load %arg5[%c0_9, %c0_10] : memref<1x4xf32, #tpu.memory_space<vmem>>, vector<1x4xf32>
    %11 = vector.broadcast %10 : vector<1x4xf32> to vector<8x4xf32>
    %12 = arith.addf %9, %11 : vector<8x4xf32>
    %cst_11 = arith.constant 0.000000e+00 : f32
    %13 = vector.broadcast %cst_11 : f32 to vector<8x4xf32>
    %14 = arith.maximumf %12, %13 : vector<8x4xf32>
    %c0_12 = arith.constant 0 : index
    %c0_13 = arith.constant 0 : index
    %15 = vector.load %arg6[%c0_12, %c0_13] : memref<4x1xf32, #tpu.memory_space<vmem>>, vector<4x1xf32>
    %cst_14 = arith.constant dense<0.000000e+00> : vector<8x1xf32>
    %16 = tpu.matmul %14, %15, %cst_14 {dimension_numbers = #tpu.dot_dimension_numbers<[1], [0], [0], [1], [0, 0, 1, 1], [], []>} : vector<8x4xf32>, vector<4x1xf32>, vector<8x1xf32> -> vector<8x1xf32>
    %c0_15 = arith.constant 0 : index
    %c0_16 = arith.constant 0 : index
    %17 = vector.load %arg7[%c0_15, %c0_16] : memref<1x1xf32, #tpu.memory_space<vmem>>, vector<1x1xf32>
    %18 = vector.broadcast %17 : vector<1x1xf32> to vector<8x1xf32>
    %19 = arith.addf %16, %18 : vector<8x1xf32>
    %cst_17 = arith.constant 0.000000e+00 : f32
    %20 = vector.broadcast %cst_17 : f32 to vector<8x1xf32>
    %21 = arith.subf %20, %19 : vector<8x1xf32>
    %22 = math.exp %21 : vector<8x1xf32>
    %cst_18 = arith.constant 1.000000e+00 : f32
    %23 = vector.broadcast %cst_18 : f32 to vector<8x1xf32>
    %24 = arith.addf %23, %22 : vector<8x1xf32>
    %cst_19 = arith.constant 1.000000e+00 : f32
    %25 = vector.broadcast %cst_19 : f32 to vector<8x1xf32>
    %26 = arith.divf %25, %24 : vector<8x1xf32>
    %c0_20 = arith.constant 0 : index
    %c0_21 = arith.constant 0 : index
    %27 = vector.load %arg8[%c0_20, %c0_21] : memref<8x1xf32, #tpu.memory_space<vmem>>, vector<8x1xf32>
    tpu.vector_store %arg8[%c0_20, %c0_21], %26 {strides = array<i32>} : memref<8x1xf32, #tpu.memory_space<vmem>>, vector<8x1xf32>,
    return
  }
  func.func @transform_0(%arg0: i32) -> (i32, i32) {
    %c0_i32 = arith.constant 0 : i32
    %c0_i32_0 = arith.constant 0 : i32
    return %arg0, %c0_i32 : i32, i32
  }
  func.func @transform_1(%arg0: i32) -> (i32, i32) {
    %c0_i32 = arith.constant 0 : i32
    %c0_i32_0 = arith.constant 0 : i32
    %c0_i32_1 = arith.constant 0 : i32
    return %c0_i32, %c0_i32_0 : i32, i32
  }
  func.func @transform_2(%arg0: i32) -> (i32, i32) {
    %c0_i32 = arith.constant 0 : i32
    %c0_i32_0 = arith.constant 0 : i32
    %c0_i32_1 = arith.constant 0 : i32
    return %c0_i32, %c0_i32_0 : i32, i32
  }
  func.func @transform_3(%arg0: i32) -> (i32, i32) {
    %c0_i32 = arith.constant 0 : i32
    %c0_i32_0 = arith.constant 0 : i32
    %c0_i32_1 = arith.constant 0 : i32
    return %c0_i32, %c0_i32_0 : i32, i32
  }
  func.func @transform_4(%arg0: i32) -> (i32, i32) {
    %c0_i32 = arith.constant 0 : i32
    %c0_i32_0 = arith.constant 0 : i32
    %c0_i32_1 = arith.constant 0 : i32
    return %c0_i32, %c0_i32_0 : i32, i32
  }
  func.func @transform_5(%arg0: i32) -> (i32, i32) {
    %c0_i32 = arith.constant 0 : i32
    %c0_i32_0 = arith.constant 0 : i32
    %c0_i32_1 = arith.constant 0 : i32
    return %c0_i32, %c0_i32_0 : i32, i32
  }
  func.func @transform_6(%arg0: i32) -> (i32, i32) {
    %c0_i32 = arith.constant 0 : i32
    %c0_i32_0 = arith.constant 0 : i32
    %c0_i32_1 = arith.constant 0 : i32
    return %c0_i32, %c0_i32_0 : i32, i32
  }
  func.func @transform_7(%arg0: i32) -> (i32, i32) {
    %c0_i32 = arith.constant 0 : i32
    %c0_i32_0 = arith.constant 0 : i32
    return %arg0, %c0_i32 : i32, i32
  }
}

</mosaic_0001>

<llo_original>
// kernel: tpu_custom_call.1
$region0: #{tpu_custom_call.1}
  #allocation0 [shape = 'u32[]', space=smem, size = 0x4, offset = 0x4, fixed_abs, tag = 'smem constant byte address 0x4 - core index']
  #allocation1 [shape = 'u32[144,128]{1,0:T(1,128)}', space=vmem, size = 0x12000, scoped, tag = 'internal scratch']
  #allocation2 [shape = 'f32[1,1]{1,0:T(1,128)S(1)}', space=vmem, size = 0x200, scoped, tag = 'scoped memory for tpu_custom_call.1']
  %s0 = inlined_call_operand.vmem [shape: f32[16,180], index: 0, kind: input, shape index: {}]
  %s1 = inlined_call_operand.vmem [shape: f32[180,10], index: 1, kind: input, shape index: {}]
  %s2 = inlined_call_operand.vmem [shape: f32[1,10], index: 2, kind: input, shape index: {}]
  %s3 = inlined_call_operand.vmem [shape: f32[10,4], index: 3, kind: input, shape index: {}]
  %s4 = inlined_call_operand.vmem [shape: f32[1,4], index: 4, kind: input, shape index: {}]
  %s5 = inlined_call_operand.vmem [shape: f32[4,1], index: 5, kind: input, shape index: {}]
  %s6 = inlined_call_operand.<no memory space> [shape: f32[1,1], index: 6, kind: input, shape index: {}]
  %s7 = inlined_call_operand.vmem [shape: f32[16,1], index: 7, kind: output, shape index: {}]
  %s8 = sld [smem:[#allocation0]]
  $region61: #{tpu_custom_call.1} parent=0
    _
  %s10 = ssub.s32 1, %s8
  %s11 = scalar_select 0, %s10, %s8
  %v12 = vstv %s6
  %13 = vst [vmem:[#allocation2] sm:$0x1] %v12
  loop: start=0, step=1, limit=4
  $region2: #{tpu_custom_call.1} parent=0 // loop_pre_header
    _
  $region3: #{tpu_custom_call.1} parent=0 // loop_header
    %s15 = sphi 0, %s19
    %p16 = scmp.ge.s32.totalorder %s15, 4
    %s25 = sphi 0, %s27
    %s28 = sphi 0, %s25
    %s29 = sphi 0, %s28
    %s45 = sphi 0, %s29
    %s49 = sphi 0, %s49
    %s51 = sphi 0, %s49
    %s52 = sphi 0, %s51
    %s66 = sphi 0, %s52
    %s70 = sphi 0, %s70
    %s72 = sphi 0, %s70
    %s73 = sphi 0, %s72
    %s87 = sphi 0, %s73
    %s91 = sphi 0, %s91
    %s93 = sphi 0, %s91
    %s94 = sphi 0, %s93
    %s108 = sphi 0, %s94
    %s112 = sphi 0, %s112
    %s114 = sphi 0, %s112
    %s115 = sphi 0, %s114
    %s129 = sphi 0, %s115
    %s133 = sphi 0, %s133
    %s135 = sphi 0, %s133
    %s136 = sphi 0, %s135
    %s150 = sphi 0, %s136
    %s154 = sphi 0, %s154
    %s156 = sphi 0, %s154
    %s157 = sphi 0, %s156
    %s171 = sphi 0, %s157
    %s177 = sphi 0, %s179
    %s180 = sphi 0, %s177
    %s181 = sphi 0, %s180
    %s197 = sphi 0, %s181
  $region4: #{tpu_custom_call.1} parent=0 // loop_header_branch
    %18 = sbr.rel (%p16) target = $region8
  $region5: #{tpu_custom_call.1} parent=0 // loop_body
    %s20 = ssub.s32 %s15, 1
    %s21 = ssub.s32 %s15, 2
    %s22 = sadd.s32 %s15, 1
    %s23 = ssub.s32 %s15, %s22
    %p24 = scmp.eq.s32.totalorder %s23, 0
    %s26 = sadd.s32 %s25, 1
    %s27 = scalar_select %p24, %s25, %s26
    %p30 = pneg %p24
    %p31 = scmp.eq.s32.totalorder %s15, 1
    %p32 = por %p30, %p31
    %p33 = scmp.ne.s32.totalorder %s25, %s28
    %p34 = scmp.eq.s32.totalorder %s15, 0
    %p35 = por %p33, %p34
    %p36 = scmp.ne.s32.totalorder %s25, %s28
    %p37 = scmp.eq.s32.totalorder %s20, 1
    %p38 = por %p36, %p37
    %p39 = scmp.ne.s32.totalorder %s28, %s29
    %p40 = scmp.eq.s32.totalorder %s20, 0
    %p41 = por %p39, %p40
    %p42 = scmp.ne.s32.totalorder %s28, %s29
    %p43 = scmp.eq.s32.totalorder %s21, 1
    %p44 = por %p42, %p43
    %p46 = scmp.ne.s32.totalorder %s29, %s45
    %p47 = scmp.eq.s32.totalorder %s21, 0
    %p48 = por %p46, %p47
    %s50 = sadd.s32 %s49, 1
    %p53 = scmp.eq.s32.totalorder %s15, 1
    %p54 = scmp.ne.s32.totalorder %s49, %s51
    %p55 = scmp.eq.s32.totalorder %s15, 0
    %p56 = por %p54, %p55
    %p57 = scmp.ne.s32.totalorder %s49, %s51
    %p58 = scmp.eq.s32.totalorder %s20, 1
    %p59 = por %p57, %p58
    %p60 = scmp.ne.s32.totalorder %s51, %s52
    %p61 = scmp.eq.s32.totalorder %s20, 0
    %p62 = por %p60, %p61
    %p63 = scmp.ne.s32.totalorder %s51, %s52
    %p64 = scmp.eq.s32.totalorder %s21, 1
    %p65 = por %p63, %p64
    %p67 = scmp.ne.s32.totalorder %s52, %s66
    %p68 = scmp.eq.s32.totalorder %s21, 0
    %p69 = por %p67, %p68
    %s71 = sadd.s32 %s70, 1
    %p74 = scmp.eq.s32.totalorder %s15, 1
    %p75 = scmp.ne.s32.totalorder %s70, %s72
    %p76 = scmp.eq.s32.totalorder %s15, 0
    %p77 = por %p75, %p76
    %p78 = scmp.ne.s32.totalorder %s70, %s72
    %p79 = scmp.eq.s32.totalorder %s20, 1
    %p80 = por %p78, %p79
    %p81 = scmp.ne.s32.totalorder %s72, %s73
    %p82 = scmp.eq.s32.totalorder %s20, 0
    %p83 = por %p81, %p82
    %p84 = scmp.ne.s32.totalorder %s72, %s73
    %p85 = scmp.eq.s32.totalorder %s21, 1
    %p86 = por %p84, %p85
    %p88 = scmp.ne.s32.totalorder %s73, %s87
    %p89 = scmp.eq.s32.totalorder %s21, 0
    %p90 = por %p88, %p89
    %s92 = sadd.s32 %s91, 1
    %p95 = scmp.eq.s32.totalorder %s15, 1
    %p96 = scmp.ne.s32.totalorder %s91, %s93
    %p97 = scmp.eq.s32.totalorder %s15, 0
    %p98 = por %p96, %p97
    %p99 = scmp.ne.s32.totalorder %s91, %s93
    %p100 = scmp.eq.s32.totalorder %s20, 1
    %p101 = por %p99, %p100
    %p102 = scmp.ne.s32.totalorder %s93, %s94
    %p103 = scmp.eq.s32.totalorder %s20, 0
    %p104 = por %p102, %p103
    %p105 = scmp.ne.s32.totalorder %s93, %s94
    %p106 = scmp.eq.s32.totalorder %s21, 1
    %p107 = por %p105, %p106
    %p109 = scmp.ne.s32.totalorder %s94, %s108
    %p110 = scmp.eq.s32.totalorder %s21, 0
    %p111 = por %p109, %p110
    %s113 = sadd.s32 %s112, 1
    %p116 = scmp.eq.s32.totalorder %s15, 1
    %p117 = scmp.ne.s32.totalorder %s112, %s114
    %p118 = scmp.eq.s32.totalorder %s15, 0
    %p119 = por %p117, %p118
    %p120 = scmp.ne.s32.totalorder %s112, %s114
    %p121 = scmp.eq.s32.totalorder %s20, 1
    %p122 = por %p120, %p121
    %p123 = scmp.ne.s32.totalorder %s114, %s115
    %p124 = scmp.eq.s32.totalorder %s20, 0
    %p125 = por %p123, %p124
    %p126 = scmp.ne.s32.totalorder %s114, %s115
    %p127 = scmp.eq.s32.totalorder %s21, 1
    %p128 = por %p126, %p127
    %p130 = scmp.ne.s32.totalorder %s115, %s129
    %p131 = scmp.eq.s32.totalorder %s21, 0
    %p132 = por %p130, %p131
    %s134 = sadd.s32 %s133, 1
    %p137 = scmp.eq.s32.totalorder %s15, 1
    %p138 = scmp.ne.s32.totalorder %s133, %s135
    %p139 = scmp.eq.s32.totalorder %s15, 0
    %p140 = por %p138, %p139
    %p141 = scmp.ne.s32.totalorder %s133, %s135
    %p142 = scmp.eq.s32.totalorder %s20, 1
    %p143 = por %p141, %p142
    %p144 = scmp.ne.s32.totalorder %s135, %s136
    %p145 = scmp.eq.s32.totalorder %s20, 0
    %p146 = por %p144, %p145
    %p147 = scmp.ne.s32.totalorder %s135, %s136
    %p148 = scmp.eq.s32.totalorder %s21, 1
    %p149 = por %p147, %p148
    %p151 = scmp.ne.s32.totalorder %s136, %s150
    %p152 = scmp.eq.s32.totalorder %s21, 0
    %p153 = por %p151, %p152
    %s155 = sadd.s32 %s154, 1
    %p158 = scmp.eq.s32.totalorder %s15, 1
    %p159 = scmp.ne.s32.totalorder %s154, %s156
    %p160 = scmp.eq.s32.totalorder %s15, 0
    %p161 = por %p159, %p160
    %p162 = scmp.ne.s32.totalorder %s154, %s156
    %p163 = scmp.eq.s32.totalorder %s20, 1
    %p164 = por %p162, %p163
    %p165 = scmp.ne.s32.totalorder %s156, %s157
    %p166 = scmp.eq.s32.totalorder %s20, 0
    %p167 = por %p165, %p166
    %p168 = scmp.ne.s32.totalorder %s156, %s157
    %p169 = scmp.eq.s32.totalorder %s21, 1
    %p170 = por %p168, %p169
    %p172 = scmp.ne.s32.totalorder %s157, %s171
    %p173 = scmp.eq.s32.totalorder %s21, 0
    %p174 = por %p172, %p173
    %s175 = ssub.s32 %s15, %s22
    %p176 = scmp.eq.s32.totalorder %s175, 0
    %s178 = sadd.s32 %s177, 1
    %s179 = scalar_select %p176, %s177, %s178
    %p182 = pneg %p176
    %p183 = scmp.eq.s32.totalorder %s15, 1
    %p184 = por %p182, %p183
    %p185 = scmp.ne.s32.totalorder %s177, %s180
    %p186 = scmp.eq.s32.totalorder %s15, 0
    %p187 = por %p185, %p186
    %p188 = scmp.ne.s32.totalorder %s177, %s180
    %p189 = scmp.eq.s32.totalorder %s20, 1
    %p190 = por %p188, %p189
    %p191 = scmp.ne.s32.totalorder %s180, %s181
    %p192 = scmp.eq.s32.totalorder %s20, 0
    %p193 = por %p191, %p192
    %p194 = scmp.ne.s32.totalorder %s180, %s181
    %p195 = scmp.eq.s32.totalorder %s21, 1
    %p196 = por %p194, %p195
    %p198 = scmp.ne.s32.totalorder %s181, %s197
    %p199 = scmp.eq.s32.totalorder %s21, 0
    %p200 = por %p198, %p199
    %p201 = scmp.le.s32.totalorder 1, %s15
    %p202 = scmp.lt.s32.totalorder %s15, 3
    %p203 = pnand %p201, %p202
    %p204 = pneg %p203
    // Predicated region
    $region9: #{tpu_custom_call.1} parent=5 // pred_check
      _
    $region10: #{tpu_custom_call.1} parent=5 // pred_check_branch
      %206 = sbr.rel (%p203) target = $region12
    $region11: #{tpu_custom_call.1} parent=5 // pred_region
      %s207 = ssub.s32 %s15, 1
      // Predicated region
      $region13: #{tpu_custom_call.1} parent=11 // pred_check
        %p208 = pneg %p62
      $region14: #{tpu_custom_call.1} parent=11 // pred_check_branch
        %210 = sbr.rel (%p208) target = $region16
      $region15: #{tpu_custom_call.1} parent=11 // pred_region
        _
      $region16: #{tpu_custom_call.1} parent=11 // pred_fallthru
        _
      // Predicated region
      $region17: #{tpu_custom_call.1} parent=11 // pred_check
        %p211 = pneg %p83
      $region18: #{tpu_custom_call.1} parent=11 // pred_check_branch
        %213 = sbr.rel (%p211) target = $region20
      $region19: #{tpu_custom_call.1} parent=11 // pred_region
        _
      $region20: #{tpu_custom_call.1} parent=11 // pred_fallthru
        _
      // Predicated region
      $region21: #{tpu_custom_call.1} parent=11 // pred_check
        %p214 = pneg %p104
      $region22: #{tpu_custom_call.1} parent=11 // pred_check_branch
        %216 = sbr.rel (%p214) target = $region24
      $region23: #{tpu_custom_call.1} parent=11 // pred_region
        _
      $region24: #{tpu_custom_call.1} parent=11 // pred_fallthru
        _
      // Predicated region
      $region25: #{tpu_custom_call.1} parent=11 // pred_check
        %p217 = pneg %p125
      $region26: #{tpu_custom_call.1} parent=11 // pred_check_branch
        %219 = sbr.rel (%p217) target = $region28
      $region27: #{tpu_custom_call.1} parent=11 // pred_region
        _
      $region28: #{tpu_custom_call.1} parent=11 // pred_fallthru
        _
      // Predicated region
      $region29: #{tpu_custom_call.1} parent=11 // pred_check
        %p220 = pneg %p146
      $region30: #{tpu_custom_call.1} parent=11 // pred_check_branch
        %222 = sbr.rel (%p220) target = $region32
      $region31: #{tpu_custom_call.1} parent=11 // pred_region
        _
      $region32: #{tpu_custom_call.1} parent=11 // pred_fallthru
        _
      // Predicated region
      $region33: #{tpu_custom_call.1} parent=11 // pred_check
        %p223 = pneg %p167
      $region34: #{tpu_custom_call.1} parent=11 // pred_check_branch
        %225 = sbr.rel (%p223) target = $region36
      $region35: #{tpu_custom_call.1} parent=11 // pred_region
        _
      $region36: #{tpu_custom_call.1} parent=11 // pred_fallthru
        _
    $region12: #{tpu_custom_call.1} parent=5 // pred_fallthru
      _
    %p226 = scmp.lt.s32.totalorder %s15, 2
    // Predicated region
    $region37: #{tpu_custom_call.1} parent=5 // pred_check
      %p227 = pneg %p226
    $region38: #{tpu_custom_call.1} parent=5 // pred_check_branch
      %229 = sbr.rel (%p227) target = $region40
    $region39: #{tpu_custom_call.1} parent=5 // pred_region
      // Predicated region
      $region41: #{tpu_custom_call.1} parent=39 // pred_check
        %p230 = pneg %p35
      $region42: #{tpu_custom_call.1} parent=39 // pred_check_branch
        %232 = sbr.rel (%p230) target = $region44
      $region43: #{tpu_custom_call.1} parent=39 // pred_region
        %p233 = scmp.lt.s32.totalorder %s15, 1
        %s234 = scalar_select %p233, %s15, 1
        %s235 = smul.addr %s234, 2
        %s236 = smul.addr %s235, 8
        %s237 = scalar_lea.vmem %s0, %s236
      $region44: #{tpu_custom_call.1} parent=39 // pred_fallthru
        _
    $region40: #{tpu_custom_call.1} parent=5 // pred_fallthru
      _
    %p238 = scmp.le.s32.totalorder 1, %s15
    %p239 = scmp.lt.s32.totalorder %s15, 3
    %p240 = pnand %p238, %p239
    %p241 = pneg %p240
    // Predicated region
    $region45: #{tpu_custom_call.1} parent=5 // pred_check
      _
    $region46: #{tpu_custom_call.1} parent=5 // pred_check_branch
      %243 = sbr.rel (%p240) target = $region48
    $region47: #{tpu_custom_call.1} parent=5 // pred_region
      %s244 = ssub.s32 %s15, 1
      %p245 = scmp.lt.s32.totalorder %s20, 1
      %s246 = scalar_select %p245, %s20, 1
      %s247 = smul.addr %s246, 2
      %s248 = smul.addr %s247, 8
      %s249 = scalar_lea.vmem %s0, %s248
      %p250 = pneg %p41
      %p251 = pneg %p38
      %p252 = pneg %p62
      %p253 = pneg %p59
      %p254 = pneg %p83
      %p255 = pneg %p80
      %p256 = pneg %p104
      %p257 = pneg %p101
      %p258 = pneg %p125
      %p259 = pneg %p122
      %p260 = pneg %p146
      %p261 = pneg %p143
      %p262 = pneg %p167
      %p263 = pneg %p164
      %p264 = pneg %p193
      %p265 = pneg %p190
      %p266 = scmp.lt.s32.totalorder %s20, 1
      %s267 = scalar_select %p266, %s20, 1
      %s268 = smul.addr %s267, 8
      %s269 = scalar_lea.vmem %s7, %s268
      %p270 = scmp.lt.s32.totalorder %s20, 1
      %s271 = scalar_select %p270, %s20, 1
      %s272 = smul.addr %s271, 2
      %s273 = smul.addr %s272, 8
      %s274 = scalar_lea.vmem %s0, %s273
      %p275 = scmp.lt.s32.totalorder %s20, 1
      %s276 = scalar_select %p275, %s20, 1
      %s277 = smul.addr %s276, 8
      %s278 = scalar_lea.vmem %s7, %s277
      %v279 = vld [vmem:[%s274] sm:$0xff]
      %v280 = vld [vmem:[%s274 + $0x8] sm:$0xff]
      %v281 = vld [vmem:[%s1] sm:$0xff]
      %v282 = vld [vmem:[%s1 + $0x8] sm:$0xff]
      %v283 = vld [vmem:[%s1 + $0x10] sm:$0xff]
      %v284 = vld [vmem:[%s1 + $0x18] sm:$0xff]
      %v285 = vld [vmem:[%s1 + $0x20] sm:$0xff]
      %v286 = vld [vmem:[%s1 + $0x28] sm:$0xff]
      %v287 = vld [vmem:[%s1 + $0x30] sm:$0xff]
      %v288 = vld [vmem:[%s1 + $0x38] sm:$0xff]
      %v289 = vld [vmem:[%s1 + $0x40] sm:$0xff]
      %v290 = vld [vmem:[%s1 + $0x48] sm:$0xff]
      %v291 = vld [vmem:[%s1 + $0x50] sm:$0xff]
      %v292 = vld [vmem:[%s1 + $0x58] sm:$0xff]
      %v293 = vld [vmem:[%s1 + $0x60] sm:$0xff]
      %v294 = vld [vmem:[%s1 + $0x68] sm:$0xff]
      %v295 = vld [vmem:[%s1 + $0x70] sm:$0xff]
      %v296 = vld [vmem:[%s1 + $0x78] sm:$0xff]
      %v297 = vld [vmem:[%s1 + $0x80] sm:$0xff]
      %v298 = vld [vmem:[%s1 + $0x88] sm:$0xff]
      %v299 = vld [vmem:[%s1 + $0x90] sm:$0xff]
      %v300 = vld [vmem:[%s1 + $0x98] sm:$0xff]
      %v301 = vld [vmem:[%s1 + $0xa0] sm:$0xff]
      %v302 = vld [vmem:[%s1 + $0xa8] sm:$0xff]
      %v303 = vld [vmem:[%s1 + $0xb0] sm:$0xf]
      %v304 = vld [vmem:[%s2] sm:$0x1]
      %v306 = vlaneseq
      %v307 = vshrl.u32 %v306, 7
      %v308 = vsub.s32 0, %v307
      %v309 = vrot.slane %v304, %v308
      %vm311 = vcmask 424960
      %v313 = vsel %vm311, %v280, 0
      %vm315 = vcmask 1043456
      %v317 = vsel %vm315, %v303, 0
      %319 = vmatprep.subr.mxu0 0.0
      %320 = vmatpush1.msra.mxu0 %v281
      %321 = vmatprep.subr.mxu0 0.0
      %322 = vmatpush1.msra.mxu0 %v282
      %323 = vmatprep.subr.mxu0 0.0
      %324 = vmatpush1.msra.mxu0 %v283
      %325 = vmatprep.subr.mxu0 0.0
      %326 = vmatpush1.msra.mxu0 %v284
      %327 = vmatprep.subr.mxu0 0.0
      %328 = vmatpush1.msra.mxu0 %v285
      %329 = vmatprep.subr.mxu0 0.0
      %330 = vmatpush1.msra.mxu0 %v286
      %331 = vmatprep.subr.mxu0 0.0
      %332 = vmatpush1.msra.mxu0 %v287
      %333 = vmatprep.subr.mxu0 0.0
      %334 = vmatpush1.msra.mxu0 %v288
      %335 = vmatprep.subr.mxu0 0.0
      %336 = vmatpush1.msra.mxu0 %v289
      %337 = vmatprep.subr.mxu0 0.0
      %338 = vmatpush1.msra.mxu0 %v290
      %339 = vmatprep.subr.mxu0 0.0
      %340 = vmatpush1.msra.mxu0 %v291
      %341 = vmatprep.subr.mxu0 0.0
      %342 = vmatpush1.msra.mxu0 %v292
      %343 = vmatprep.subr.mxu0 0.0
      %344 = vmatpush1.msra.mxu0 %v293
      %345 = vmatprep.subr.mxu0 0.0
      %346 = vmatpush1.msra.mxu0 %v294
      %347 = vmatprep.subr.mxu0 0.0
      %348 = vmatpush1.msra.mxu0 %v295
      %349 = vmatprep.subr.mxu0 0.0
      %350 = vmatpush1.msra.mxu0 %v296
      %351 = vmatprep.subr.mxu0 0.0
      %352 = vmatpush1.msra.mxu0 %v297
      %353 = vmatprep.subr.mxu0 0.0
      %354 = vmatpush1.msra.mxu0 %v298
      %355 = vmatprep.subr.mxu0 0.0
      %356 = vmatpush1.msra.mxu0 %v299
      %357 = vmatprep.subr.mxu0 0.0
      %358 = vmatpush1.msra.mxu0 %v300
      %359 = vmatprep.subr.mxu0 0.0
      %360 = vmatpush1.msra.mxu0 %v301
      %361 = vmatprep.subr.mxu0 0.0
      %362 = vmatpush1.msra.mxu0 %v302
      %363 = vmatprep.subr.mxu0 0.0
      %364 = vmatpush1.msra.mxu0 %v317
      %365 = vmatprep.subr.mxu0 0.0
      %366 = vmatpush1.msra.mxu0 0.0
      %367 = vmatprep.subr.mxu0 0.0
      %368 = vmatpush1.msra.mxu0 0.0
      %369 = vmatprep.subr.mxu0 0.0
      %370 = vmatpush1.msra.mxu0 0.0
      %371 = vmatprep.subr.mxu0 0.0
      %372 = vmatpush1.msra.mxu0 0.0
      %373 = vmatprep.subr.mxu0 0.0
      %374 = vmatpush1.msra.mxu0 0.0
      %375 = vmatprep.subr.mxu0 0.0
      %376 = vmatpush1.msra.mxu0 0.0
      %377 = vmatprep.subr.mxu0 0.0
      %378 = vmatpush1.msra.mxu0 0.0
      %379 = vmatprep.subr.mxu0 0.0
      %380 = vmatpush1.msra.mxu0 0.0
      %381 = vmatprep.subr.mxu0 0.0
      %382 = vmatpush1.msra.mxu0 0.0
      %383 = vmatprep.mubr.f32.mxu0 %v313
      %384 = vmatmul.mubr.f32.gmra.mrb[0].mxu0 %v279
      %v385 = vpop.f32.mrb[0].mxu0
      %v386 = vadd.f32 %v309, %v385
      %v387 = vpop.f32.mrb[0].mxu0
      %388 = vdwg.mxu0
      %v389 = vmax.f32 %v386, 0.0
      %v390 = vld [vmem:[%s3] sm:$0xff]
      %v391 = vld [vmem:[%s3 + $0x8] sm:$0x3]
      %v392 = vld [vmem:[%s4] sm:$0x1]
      %v394 = vlaneseq
      %v395 = vshrl.u32 %v394, 7
      %v396 = vsub.s32 0, %v395
      %v397 = vrot.slane %v392, %v396
      %vm399 = vcmask 80896
      %v401 = vsel %vm399, %v389, 0
      %vm403 = vcmask 1041408
      %v405 = vsel %vm403, %v391, 0
      %407 = vmatprep.subr.mxu0 0.0
      %408 = vmatpush1.msra.mxu0 %v390
      %409 = vmatprep.subr.mxu0 0.0
      %410 = vmatpush1.msra.mxu0 %v405
      %411 = vmatprep.subr.mxu0 0.0
      %412 = vmatpush1.msra.mxu0 0.0
      %413 = vmatprep.subr.mxu0 0.0
      %414 = vmatpush1.msra.mxu0 0.0
      %415 = vmatprep.subr.mxu0 0.0
      %416 = vmatpush1.msra.mxu0 0.0
      %417 = vmatprep.subr.mxu0 0.0
      %418 = vmatpush1.msra.mxu0 0.0
      %419 = vmatprep.subr.mxu0 0.0
      %420 = vmatpush1.msra.mxu0 0.0
      %421 = vmatprep.subr.mxu0 0.0
      %422 = vmatpush1.msra.mxu0 0.0
      %423 = vmatprep.subr.mxu0 0.0
      %424 = vmatpush1.msra.mxu0 0.0
      %425 = vmatprep.subr.mxu0 0.0
      %426 = vmatpush1.msra.mxu0 0.0
      %427 = vmatprep.subr.mxu0 0.0
      %428 = vmatpush1.msra.mxu0 0.0
      %429 = vmatprep.subr.mxu0 0.0
      %430 = vmatpush1.msra.mxu0 0.0
      %431 = vmatprep.subr.mxu0 0.0
      %432 = vmatpush1.msra.mxu0 0.0
      %433 = vmatprep.subr.mxu0 0.0
      %434 = vmatpush1.msra.mxu0 0.0
      %435 = vmatprep.subr.mxu0 0.0
      %436 = vmatpush1.msra.mxu0 0.0
      %437 = vmatprep.subr.mxu0 0.0
      %438 = vmatpush1.msra.mxu0 0.0
      %439 = vmatprep.subr.mxu0 0.0
      %440 = vmatpush1.msra.mxu0 0.0
      %441 = vmatprep.subr.mxu0 0.0
      %442 = vmatpush1.msra.mxu0 0.0
      %443 = vmatprep.subr.mxu0 0.0
      %444 = vmatpush1.msra.mxu0 0.0
      %445 = vmatprep.subr.mxu0 0.0
      %446 = vmatpush1.msra.mxu0 0.0
      %447 = vmatprep.subr.mxu0 0.0
      %448 = vmatpush1.msra.mxu0 0.0
      %449 = vmatprep.subr.mxu0 0.0
      %450 = vmatpush1.msra.mxu0 0.0
      %451 = vmatprep.subr.mxu0 0.0
      %452 = vmatpush1.msra.mxu0 0.0
      %453 = vmatprep.subr.mxu0 0.0
      %454 = vmatpush1.msra.mxu0 0.0
      %455 = vmatprep.subr.mxu0 0.0
      %456 = vmatpush1.msra.mxu0 0.0
      %457 = vmatprep.subr.mxu0 0.0
      %458 = vmatpush1.msra.mxu0 0.0
      %459 = vmatprep.subr.mxu0 0.0
      %460 = vmatpush1.msra.mxu0 0.0
      %461 = vmatprep.subr.mxu0 0.0
      %462 = vmatpush1.msra.mxu0 0.0
      %463 = vmatprep.subr.mxu0 0.0
      %464 = vmatpush1.msra.mxu0 0.0
      %465 = vmatprep.subr.mxu0 0.0
      %466 = vmatpush1.msra.mxu0 0.0
      %467 = vmatprep.subr.mxu0 0.0
      %468 = vmatpush1.msra.mxu0 0.0
      %469 = vmatprep.subr.mxu0 0.0
      %470 = vmatpush1.msra.mxu0 0.0
      %471 = vmatprep.mubr.f32.mxu0 0.0
      %472 = vmatmul.mubr.f32.gmra.mrb[0].mxu0 %v401
      %v473 = vpop.f32.mrb[0].mxu0
      %v474 = vadd.f32 %v397, %v473
      %v475 = vpop.f32.mrb[0].mxu0
      %476 = vdwg.mxu0
      %v477 = vmax.f32 %v474, 0.0
      %v478 = vld [vmem:[%s5] sm:$0xf]
      %v479 = vld [vmem:[#allocation2] sm:$0x1]
      %v481 = vlaneseq
      %v482 = vshrl.u32 %v481, 7
      %v483 = vsub.s32 0, %v482
      %v484 = vrot.slane %v479, %v483
      %vm486 = vcmask 31744
      %v488 = vsel %vm486, %v477, 0
      %v491 = vsel %vm315, %v478, 0
      %493 = vmatprep.subr.mxu0 0.0
      %494 = vmatpush1.msra.mxu0 %v491
      %495 = vmatprep.subr.mxu0 0.0
      %496 = vmatpush1.msra.mxu0 0.0
      %497 = vmatprep.subr.mxu0 0.0
      %498 = vmatpush1.msra.mxu0 0.0
      %499 = vmatprep.subr.mxu0 0.0
      %500 = vmatpush1.msra.mxu0 0.0
      %501 = vmatprep.subr.mxu0 0.0
      %502 = vmatpush1.msra.mxu0 0.0
      %503 = vmatprep.subr.mxu0 0.0
      %504 = vmatpush1.msra.mxu0 0.0
      %505 = vmatprep.subr.mxu0 0.0
      %506 = vmatpush1.msra.mxu0 0.0
      %507 = vmatprep.subr.mxu0 0.0
      %508 = vmatpush1.msra.mxu0 0.0
      %509 = vmatprep.subr.mxu0 0.0
      %510 = vmatpush1.msra.mxu0 0.0
      %511 = vmatprep.subr.mxu0 0.0
      %512 = vmatpush1.msra.mxu0 0.0
      %513 = vmatprep.subr.mxu0 0.0
      %514 = vmatpush1.msra.mxu0 0.0
      %515 = vmatprep.subr.mxu0 0.0
      %516 = vmatpush1.msra.mxu0 0.0
      %517 = vmatprep.subr.mxu0 0.0
      %518 = vmatpush1.msra.mxu0 0.0
      %519 = vmatprep.subr.mxu0 0.0
      %520 = vmatpush1.msra.mxu0 0.0
      %521 = vmatprep.subr.mxu0 0.0
      %522 = vmatpush1.msra.mxu0 0.0
      %523 = vmatprep.subr.mxu0 0.0
      %524 = vmatpush1.msra.mxu0 0.0
      %525 = vmatprep.subr.mxu0 0.0
      %526 = vmatpush1.msra.mxu0 0.0
      %527 = vmatprep.subr.mxu0 0.0
      %528 = vmatpush1.msra.mxu0 0.0
      %529 = vmatprep.subr.mxu0 0.0
      %530 = vmatpush1.msra.mxu0 0.0
      %531 = vmatprep.subr.mxu0 0.0
      %532 = vmatpush1.msra.mxu0 0.0
      %533 = vmatprep.subr.mxu0 0.0
      %534 = vmatpush1.msra.mxu0 0.0
      %535 = vmatprep.subr.mxu0 0.0
      %536 = vmatpush1.msra.mxu0 0.0
      %537 = vmatprep.subr.mxu0 0.0
      %538 = vmatpush1.msra.mxu0 0.0
      %539 = vmatprep.subr.mxu0 0.0
      %540 = vmatpush1.msra.mxu0 0.0
      %541 = vmatprep.subr.mxu0 0.0
      %542 = vmatpush1.msra.mxu0 0.0
      %543 = vmatprep.subr.mxu0 0.0
      %544 = vmatpush1.msra.mxu0 0.0
      %545 = vmatprep.subr.mxu0 0.0
      %546 = vmatpush1.msra.mxu0 0.0
      %547 = vmatprep.subr.mxu0 0.0
      %548 = vmatpush1.msra.mxu0 0.0
      %549 = vmatprep.subr.mxu0 0.0
      %550 = vmatpush1.msra.mxu0 0.0
      %551 = vmatprep.subr.mxu0 0.0
      %552 = vmatpush1.msra.mxu0 0.0
      %553 = vmatprep.subr.mxu0 0.0
      %554 = vmatpush1.msra.mxu0 0.0
      %555 = vmatprep.subr.mxu0 0.0
      %556 = vmatpush1.msra.mxu0 0.0
      %557 = vmatprep.mubr.f32.mxu0 0.0
      %558 = vmatmul.mubr.f32.gmra.mrb[0].mxu0 %v488
      %v559 = vpop.f32.mrb[0].mxu0
      %v560 = vadd.f32 %v484, %v559
      %v561 = vpop.f32.mrb[0].mxu0
      %562 = vdwg.mxu0
      %v563 = vsub.f32 0.0, %v560
      %v564 = vmul.f32 %v563, 1.442695
      %v565 = vpow.pop %v564
      %v566 = vadd.f32 %v565, 1.0
      %v567 = vrcp.pop %v566
      %v568 = vmul.f32 1.0, %v567
      %vm569 = vcmask 7168
      %570 = vst.msk [vmem:[%s278] sm:$0xff] %vm569, %v568
      %p571 = scmp.lt.s32.totalorder %s20, 1
      %s572 = scalar_select %p571, %s20, 1
      %s573 = smul.addr %s572, 8
      %s574 = scalar_lea.vmem %s7, %s573
      // Predicated region
      $region49: #{tpu_custom_call.1} parent=47 // pred_check
        %p575 = pneg %p190
      $region50: #{tpu_custom_call.1} parent=47 // pred_check_branch
        %577 = sbr.rel (%p575) target = $region52
      $region51: #{tpu_custom_call.1} parent=47 // pred_region
        _
      $region52: #{tpu_custom_call.1} parent=47 // pred_fallthru
        _
    $region48: #{tpu_custom_call.1} parent=5 // pred_fallthru
      _
    %p578 = scmp.le.s32.totalorder 2, %s15
    // Predicated region
    $region53: #{tpu_custom_call.1} parent=5 // pred_check
      %p579 = pneg %p578
    $region54: #{tpu_custom_call.1} parent=5 // pred_check_branch
      %581 = sbr.rel (%p579) target = $region56
    $region55: #{tpu_custom_call.1} parent=5 // pred_region
      %s582 = ssub.s32 %s15, 2
      // Predicated region
      $region57: #{tpu_custom_call.1} parent=55 // pred_check
        %p583 = pneg %p196
      $region58: #{tpu_custom_call.1} parent=55 // pred_check_branch
        %585 = sbr.rel (%p583) target = $region60
      $region59: #{tpu_custom_call.1} parent=55 // pred_region
        %p586 = scmp.lt.s32.totalorder %s21, 1
        %s587 = scalar_select %p586, %s21, 1
        %s588 = smul.addr %s587, 8
        %s589 = scalar_lea.vmem %s7, %s588
      $region60: #{tpu_custom_call.1} parent=55 // pred_fallthru
        _
    $region56: #{tpu_custom_call.1} parent=5 // pred_fallthru
      _
  $region6: #{tpu_custom_call.1} parent=0 // loop_footer
    %s19 = sadd.s32 1, %s15
  $region7: #{tpu_custom_call.1} parent=0 // loop_footer_branch
    %14 = sbr.rel target = $region3
  $region8: #{tpu_custom_call.1} parent=0 // loop_exit
    _

</llo_original>
